<compile_context>
chip_gen: v5e
topology: v5e:2x2
jax: 0.10.0
libtpu: 0.0.40
codegen_flags: <defaults>
</compile_context>

<pallas_src>
import functools

import jax
import jax.numpy as jnp
import numpy as np
from jax import lax
from jax.experimental import pallas as pl
from jax.experimental.pallas import tpu as pltpu


# ------------------------------- Pallas kernel ------------------------------ #

def _swiglu_kernel(x_ref, w13_ref, w2_ref, o_ref, *, th, compute_dtype):
    # Blocks:
    #   x_ref   : (tm, E)        activation rows (f32 in HBM, cast for the MXU)
    #   w13_ref : (2*th, E)      rows [0:th] = w1 tile j, rows [th:2th] = w3 tile j
    #   w2_ref  : (E, th)        torch-layout (E, H) slice
    #   o_ref   : (tm, E)  f32   output rows, VMEM-resident across the H axis
    j = pl.program_id(1)

    @pl.when(j == 0)
    def _init():
        o_ref[...] = jnp.zeros_like(o_ref)

    x = x_ref[...].astype(compute_dtype)
    w13 = w13_ref[...]          # already compute_dtype in HBM
    w2 = w2_ref[...]            # already compute_dtype in HBM

    # Contract on the LAST axis of both operands == x @ w.T with torch-layout
    # weights, so the MXU consumes them untransposed.
    dn = (((1,), (1,)), ((), ()))
    h = lax.dot_general(x, w13, dn, preferred_element_type=jnp.float32)  # (tm, 2*th)
    h1 = h[:, :th]
    h3 = h[:, th:]

    # SwiGLU gate in f32 (VPU; the sigmoid's exp goes to the EUP slot).
    g = (h1 * jax.nn.sigmoid(h1)) * h3
    g = g.astype(compute_dtype)

    # Partial down-projection for this hidden tile, accumulated into the
    # resident f32 output tile (no separate scratch accumulator).
    o_ref[...] += lax.dot_general(g, w2, dn, preferred_element_type=jnp.float32)


# --------------------------------- helpers ---------------------------------- #

def _pick_tile(dim, max_tile, multiple):
    """Largest t <= max_tile with t % multiple == 0 and dim % t == 0.

    `dim` is always pre-padded to a multiple of `multiple`, so this never needs
    the old "return the whole dimension" fallback.
    """
    t = min(max_tile, dim)
    t -= t % multiple
    while t >= multiple:
        if dim % t == 0:
            return t
        t -= multiple
    return dim


def _vmem_bytes(tm, th, E, x_bytes, w_bytes, out_bytes):
    """Approximate per-step VMEM residency (double-buffered inputs)."""
    x_b = 2 * tm * E * x_bytes             # x tile, double-buffered
    w13_b = 2 * (2 * th) * E * w_bytes     # fused w1||w3 tile, double-buffered
    w2_b = 2 * E * th * w_bytes            # w2 tile, double-buffered
    o_b = 2 * tm * E * out_bytes           # resident f32 output tile
    mid_b = tm * (2 * th) * 4 + tm * th * w_bytes   # h (f32) + g intermediates
    return x_b + w13_b + w2_b + o_b + mid_b


def _vmem_capacity_bytes():
    try:
        return int(pltpu.get_tpu_info().vmem_capacity_bytes)
    except Exception:
        return 64 * 2**20   # conservative default (v7x per-TensorCore)


def _fit_tiles(Mp, Hp, E, tm0, th0, x_bytes, w_bytes, out_bytes, budget):
    tm = _pick_tile(Mp, tm0, 8)
    th = _pick_tile(Hp, th0, 128)
    while _vmem_bytes(tm, th, E, x_bytes, w_bytes, out_bytes) > budget:
        if th > 128 and (th >= tm or tm <= 64):
            th = _pick_tile(Hp, max(th // 2, 128), 128)
        elif tm > 8:
            tm = _pick_tile(Mp, max(tm // 2, 8), 8)
        elif th > 128:
            th = _pick_tile(Hp, max(th // 2, 128), 128)
        else:
            break
    return tm, th


# --------------------------------- wrapper ---------------------------------- #

def swiglu(x, w1, w2, w3, *, tm=512, th=512, compute_dtype=jnp.bfloat16):
    """SwiGLU forward with torch nn.Linear weight layouts.

    x : (..., E) float32
    w1, w3 : (H, E)   (out_features, in_features)
    w2     : (E, H)
    compute_dtype : dtype of the weights in HBM and of the MXU dot inputs
        (accumulation is always f32).  Use jnp.float32 for an exact-f32 path.
    Returns (..., E) float32.
    """
    orig_shape = x.shape
    E = orig_shape[-1]
    H = w1.shape[0]

    x2d = x.reshape(-1, E)
    M = x2d.shape[0]

    # Pad rows to a sublane multiple (M tile second-minor must be %8).
    m_pad = -M % 8
    if m_pad:
        x2d = jnp.pad(x2d, ((0, m_pad), (0, 0)))
    Mp = M + m_pad

    # Pad H to a multiple of 128 so th is always a clean lane multiple.  Zero
    # rows in w1/w3 and zero columns in w2 contribute silu(0)*0 = 0 -> exact.
    h_pad = -H % 128
    if h_pad:
        w1 = jnp.pad(w1, ((0, h_pad), (0, 0)))
        w3 = jnp.pad(w3, ((0, h_pad), (0, 0)))
        w2 = jnp.pad(w2, ((0, 0), (0, h_pad)))
    Hp = H + h_pad

    x_bytes = jnp.dtype(x2d.dtype).itemsize
    w_bytes = jnp.dtype(compute_dtype).itemsize
    out_bytes = 4  # f32 output / accumulator

    vmem_cap = _vmem_capacity_bytes()
    budget = int(0.70 * vmem_cap)
    tm_, th_ = _fit_tiles(Mp, Hp, E, tm, th, x_bytes, w_bytes, out_bytes, budget)

    needed = _vmem_bytes(tm_, th_, E, x_bytes, w_bytes, out_bytes)
    vmem_limit = int(min(int(0.92 * vmem_cap),
                         max(needed + (8 << 20), 32 << 20)))

    grid = (Mp // tm_, Hp // th_)

    # Interleave w1 / w3 per hidden tile: rows [j*2th : j*2th+th] are w1 tile j,
    # the next th rows are w3 tile j.  Cast to compute_dtype once in HBM so the
    # streamed bytes (and VMEM weight footprint) are halved for bf16.
    nj = Hp // th_
    w13 = jnp.concatenate(
        [w1.reshape(nj, th_, E), w3.reshape(nj, th_, E)], axis=1
    ).reshape(2 * Hp, E).astype(compute_dtype)
    w2c = w2.astype(compute_dtype)

    # Only shard the M axis across TensorCores when there is real M-parallel
    # work; otherwise both cores would just duplicate the weight streaming.
    m_sem = "parallel" if grid[0] >= 2 else "arbitrary"

    kernel = functools.partial(_swiglu_kernel, th=th_, compute_dtype=compute_dtype)

    out = pl.pallas_call(
        kernel,
        out_shape=jax.ShapeDtypeStruct((Mp, E), jnp.float32),
        grid=grid,
        in_specs=[
            pl.BlockSpec((tm_, E), lambda i, j: (i, 0)),        # x rows
            pl.BlockSpec((2 * th_, E), lambda i, j: (j, 0)),    # fused w1||w3 tile
            pl.BlockSpec((E, th_), lambda i, j: (0, j)),        # w2 columns
        ],
        out_specs=pl.BlockSpec((tm_, E), lambda i, j: (i, 0)),
        compiler_params=pltpu.CompilerParams(
            dimension_semantics=(m_sem, "arbitrary"),
            vmem_limit_bytes=vmem_limit,
        ),
    )(x2d, w13, w2c)

    if m_pad:
        out = out[:M]
    return out.reshape(orig_shape[:-1] + (E,))


# ------------------------------- pure-JAX ref ------------------------------- #

def _reference(x, w1, w2, w3):
    p = lax.Precision.HIGHEST
    h1 = jnp.dot(x, w1.T, precision=p)
    h3 = jnp.dot(x, w3.T, precision=p)
    return jnp.dot((h1 * jax.nn.sigmoid(h1)) * h3, w2.T, precision=p)


# ---------------------------------- main ------------------------------------ #

if __name__ == "__main__":
    batch, seq_len = 2, 8
    embed_size, hidden_size = 64, 128

    key = jax.random.PRNGKey(0)
    kx, k1, k2, k3 = jax.random.split(key, 4)

    x = jax.random.normal(kx, (batch, seq_len, embed_size), dtype=jnp.float32)
    # torch nn.Linear weights: (out_features, in_features)
    w1 = 0.05 * jax.random.normal(k1, (hidden_size, embed_size), jnp.float32)
    w2 = 0.05 * jax.random.normal(k2, (embed_size, hidden_size), jnp.float32)
    w3 = 0.05 * jax.random.normal(k3, (hidden_size, embed_size), jnp.float32)

    ref = np.asarray(_reference(x, w1, w2, w3))

    # Exact-f32 path: preserves the PyTorch f32 forward semantics.
    out_f32 = jax.block_until_ready(swiglu(x, w1, w2, w3, compute_dtype=jnp.float32))
    np.testing.assert_allclose(np.asarray(out_f32), ref, rtol=1e-2, atol=2e-3)

    # Default fast path: bf16 dot inputs / bf16 weights in HBM, f32 accumulation.
    out_bf16 = jax.block_until_ready(swiglu(x, w1, w2, w3))
    np.testing.assert_allclose(np.asarray(out_bf16), ref, rtol=5e-2, atol=1e-2)

    print("KERNEL_OK")
</pallas_src>

<mosaic_0001>
module attributes {stable_mosaic.version = 11 : i64} {
  func.func @_swiglu_kernel(%arg0: i32, %arg1: i32, %arg2: memref<16x64xf32, #tpu.memory_space<vmem>>, %arg3: memref<256x64xf32, #tpu.memory_space<vmem>>, %arg4: memref<64x128xf32, #tpu.memory_space<vmem>>, %arg5: memref<16x64xf32, #tpu.memory_space<vmem>>) attributes {dimension_semantics = [#tpu.dimension_semantics<arbitrary>, #tpu.dimension_semantics<arbitrary>], iteration_bounds = array<i64: 1, 1>, scalar_prefetch = 0 : i64, scratch_operands = 0 : i64, tpu.core_type = #tpu.core_type<tc>, window_params = [{transform_indices = @transform_0, window_bounds = array<i64: 16, 64>}, {transform_indices = @transform_1, window_bounds = array<i64: 256, 64>}, {transform_indices = @transform_2, window_bounds = array<i64: 64, 128>}, {transform_indices = @transform_3, window_bounds = array<i64: 16, 64>}]} {
    %c0_i32 = arith.constant 0 : i32
    %0 = arith.cmpi eq, %arg1, %c0_i32 : i32
    %1 = arith.extui %0 : i1 to i32
    %c0_i32_0 = arith.constant 0 : i32
    %2 = arith.cmpi ne, %1, %c0_i32_0 : i32
    scf.if %2 {
      %cst_12 = arith.constant 0.000000e+00 : f32
      %20 = vector.broadcast %cst_12 : f32 to vector<16x64xf32>
      %c0_13 = arith.constant 0 : index
      %c0_14 = arith.constant 0 : index
      %21 = vector.load %arg5[%c0_13, %c0_14] : memref<16x64xf32, #tpu.memory_space<vmem>>, vector<16x64xf32>
      tpu.vector_store %arg5[%c0_13, %c0_14], %20 {strides = array<i32>} : memref<16x64xf32, #tpu.memory_space<vmem>>, vector<16x64xf32>,
    } else {
    }
    %c0 = arith.constant 0 : index
    %c0_1 = arith.constant 0 : index
    %3 = vector.load %arg2[%c0, %c0_1] : memref<16x64xf32, #tpu.memory_space<vmem>>, vector<16x64xf32>
    %c0_2 = arith.constant 0 : index
    %c0_3 = arith.constant 0 : index
    %4 = vector.load %arg3[%c0_2, %c0_3] : memref<256x64xf32, #tpu.memory_space<vmem>>, vector<256x64xf32>
    %c0_4 = arith.constant 0 : index
    %c0_5 = arith.constant 0 : index
    %5 = vector.load %arg4[%c0_4, %c0_5] : memref<64x128xf32, #tpu.memory_space<vmem>>, vector<64x128xf32>
    %cst = arith.constant dense<0.000000e+00> : vector<16x256xf32>
    %6 = tpu.matmul %3, %4, %cst {dimension_numbers = #tpu.dot_dimension_numbers<[1], [1], [0], [0], [0, 0, 1, 0], [], []>} : vector<16x64xf32>, vector<256x64xf32>, vector<16x256xf32> -> vector<16x256xf32>
    %7 = vector.extract_strided_slice %6 {offsets = [0, 0], sizes = [16, 128], strides = [1, 1]} : vector<16x256xf32> to vector<16x128xf32>
    %8 = vector.extract_strided_slice %6 {offsets = [0, 128], sizes = [16, 128], strides = [1, 1]} : vector<16x256xf32> to vector<16x128xf32>
    %9 = arith.negf %7 : vector<16x128xf32>
    %10 = math.exp %9 : vector<16x128xf32>
    %cst_6 = arith.constant 1.000000e+00 : f32
    %11 = vector.broadcast %cst_6 : f32 to vector<16x128xf32>
    %12 = arith.addf %11, %10 : vector<16x128xf32>
    %13 = arith.divf %11, %12 : vector<16x128xf32>
    %14 = arith.mulf %7, %13 : vector<16x128xf32>
    %15 = arith.mulf %14, %8 : vector<16x128xf32>
    %c0_7 = arith.constant 0 : index
    %c0_8 = arith.constant 0 : index
    %16 = vector.load %arg5[%c0_7, %c0_8] : memref<16x64xf32, #tpu.memory_space<vmem>>, vector<16x64xf32>
    %cst_9 = arith.constant dense<0.000000e+00> : vector<16x64xf32>
    %17 = tpu.matmul %15, %5, %cst_9 {dimension_numbers = #tpu.dot_dimension_numbers<[1], [1], [0], [0], [0, 0, 1, 0], [], []>} : vector<16x128xf32>, vector<64x128xf32>, vector<16x64xf32> -> vector<16x64xf32>
    %18 = arith.addf %16, %17 : vector<16x64xf32>
    %c0_10 = arith.constant 0 : index
    %c0_11 = arith.constant 0 : index
    %19 = vector.load %arg5[%c0_10, %c0_11] : memref<16x64xf32, #tpu.memory_space<vmem>>, vector<16x64xf32>
    tpu.vector_store %arg5[%c0_10, %c0_11], %18 {strides = array<i32>} : memref<16x64xf32, #tpu.memory_space<vmem>>, vector<16x64xf32>,
    return
  }
  func.func @transform_0(%arg0: i32, %arg1: i32) -> (i32, i32) {
    %c0_i32 = arith.constant 0 : i32
    %c0_i32_0 = arith.constant 0 : i32
    return %arg0, %c0_i32 : i32, i32
  }
  func.func @transform_1(%arg0: i32, %arg1: i32) -> (i32, i32) {
    %c0_i32 = arith.constant 0 : i32
    %c0_i32_0 = arith.constant 0 : i32
    return %arg1, %c0_i32 : i32, i32
  }
  func.func @transform_2(%arg0: i32, %arg1: i32) -> (i32, i32) {
    %c0_i32 = arith.constant 0 : i32
    %c0_i32_0 = arith.constant 0 : i32
    return %c0_i32, %arg1 : i32, i32
  }
  func.func @transform_3(%arg0: i32, %arg1: i32) -> (i32, i32) {
    %c0_i32 = arith.constant 0 : i32
    %c0_i32_0 = arith.constant 0 : i32
    return %arg0, %c0_i32 : i32, i32
  }
}

</mosaic_0001>

<llo_original>
// kernel: tpu_custom_call.1
$region0: #{tpu_custom_call.1}
  #allocation0 [shape = 'u32[]', space=smem, size = 0x4, offset = 0x4, fixed_abs, tag = 'smem constant byte address 0x4 - core index']
  #allocation1 [shape = 'u32[72,128]{1,0:T(1,128)}', space=vmem, size = 0x9000, scoped, tag = 'internal scratch']
  %s0 = inlined_call_operand.vmem [shape: f32[16,64], index: 0, kind: input, shape index: {}]
  %s1 = inlined_call_operand.vmem [shape: f32[256,64], index: 1, kind: input, shape index: {}]
  %s2 = inlined_call_operand.vmem [shape: f32[64,128], index: 2, kind: input, shape index: {}]
  %s3 = inlined_call_operand.hbm [shape: f32[16,64], index: 3, kind: output, shape index: {}]
  %s4 = sld [smem:[#allocation0]]
  $region26: #{tpu_custom_call.1} parent=0
    _
  %s6 = ssub.s32 1, %s4
  %s7 = scalar_select 0, %s6, %s4
  $region1: #{tpu_custom_call.1} parent=0
    #allocation2 [shape = 'u8[8192]{0}', space=vmem, size = 0x2000, scoped, tag = 'output window, operand 0, single buffered']
    #allocation3 [shape = 's32[1]{0}', space=sflag, size = 0x4, scoped, tag = 'scoped memory for tpu_custom_call.1']
    %8 = vsyncpa [#allocation3], 0
    // Predicated region
    $region2: #{tpu_custom_call.1} parent=1 // pred_check
      _
    $region3: #{tpu_custom_call.1} parent=1 // pred_check_branch
      %10 = sbr.rel (0) target = $region5
    $region4: #{tpu_custom_call.1} parent=1 // pred_region
      _
    $region5: #{tpu_custom_call.1} parent=1 // pred_fallthru
      _
    // Predicated region
    $region6: #{tpu_custom_call.1} parent=1 // pred_check
      _
    $region7: #{tpu_custom_call.1} parent=1 // pred_check_branch
      %12 = sbr.rel (0) target = $region9
    $region8: #{tpu_custom_call.1} parent=1 // pred_region
      _
    $region9: #{tpu_custom_call.1} parent=1 // pred_fallthru
      _
    // Predicated region
    $region10: #{tpu_custom_call.1} parent=1 // pred_check
      _
    $region11: #{tpu_custom_call.1} parent=1 // pred_check_branch
      %14 = sbr.rel (0) target = $region13
    $region12: #{tpu_custom_call.1} parent=1 // pred_region
      _
    $region13: #{tpu_custom_call.1} parent=1 // pred_fallthru
      _
    %p15 = scmp.eq.s32.totalorder 0, 0
    // Predicated region
    $region14: #{tpu_custom_call.1} parent=1 // pred_check
      %p16 = pneg %p15
    $region15: #{tpu_custom_call.1} parent=1 // pred_check_branch
      %18 = sbr.rel (%p16) target = $region17
    $region16: #{tpu_custom_call.1} parent=1 // pred_region
      %vm19 = vcmask 523264
      %20 = vst.msk [vmem:[#allocation2] sm:$0xff] %vm19, 0.0
      %21 = vst.msk [vmem:[#allocation2 + $0x8] sm:$0xff] %vm19, 0.0
    $region17: #{tpu_custom_call.1} parent=1 // pred_fallthru
      _
    %v22 = vld [vmem:[%s0] sm:$0xff]
    %v23 = vld [vmem:[%s0 + $0x8] sm:$0xff]
    %v24 = vld [vmem:[%s1] sm:$0xff]
    %v25 = vld [vmem:[%s1 + $0x8] sm:$0xff]
    %v26 = vld [vmem:[%s1 + $0x10] sm:$0xff]
    %v27 = vld [vmem:[%s1 + $0x18] sm:$0xff]
    %v28 = vld [vmem:[%s1 + $0x20] sm:$0xff]
    %v29 = vld [vmem:[%s1 + $0x28] sm:$0xff]
    %v30 = vld [vmem:[%s1 + $0x30] sm:$0xff]
    %v31 = vld [vmem:[%s1 + $0x38] sm:$0xff]
    %v32 = vld [vmem:[%s1 + $0x40] sm:$0xff]
    %v33 = vld [vmem:[%s1 + $0x48] sm:$0xff]
    %v34 = vld [vmem:[%s1 + $0x50] sm:$0xff]
    %v35 = vld [vmem:[%s1 + $0x58] sm:$0xff]
    %v36 = vld [vmem:[%s1 + $0x60] sm:$0xff]
    %v37 = vld [vmem:[%s1 + $0x68] sm:$0xff]
    %v38 = vld [vmem:[%s1 + $0x70] sm:$0xff]
    %v39 = vld [vmem:[%s1 + $0x78] sm:$0xff]
    %v40 = vld [vmem:[%s1 + $0x80] sm:$0xff]
    %v41 = vld [vmem:[%s1 + $0x88] sm:$0xff]
    %v42 = vld [vmem:[%s1 + $0x90] sm:$0xff]
    %v43 = vld [vmem:[%s1 + $0x98] sm:$0xff]
    %v44 = vld [vmem:[%s1 + $0xa0] sm:$0xff]
    %v45 = vld [vmem:[%s1 + $0xa8] sm:$0xff]
    %v46 = vld [vmem:[%s1 + $0xb0] sm:$0xff]
    %v47 = vld [vmem:[%s1 + $0xb8] sm:$0xff]
    %v48 = vld [vmem:[%s1 + $0xc0] sm:$0xff]
    %v49 = vld [vmem:[%s1 + $0xc8] sm:$0xff]
    %v50 = vld [vmem:[%s1 + $0xd0] sm:$0xff]
    %v51 = vld [vmem:[%s1 + $0xd8] sm:$0xff]
    %v52 = vld [vmem:[%s1 + $0xe0] sm:$0xff]
    %v53 = vld [vmem:[%s1 + $0xe8] sm:$0xff]
    %v54 = vld [vmem:[%s1 + $0xf0] sm:$0xff]
    %v55 = vld [vmem:[%s1 + $0xf8] sm:$0xff]
    %v56 = vld [vmem:[%s2] sm:$0xff]
    %v57 = vld [vmem:[%s2 + $0x8] sm:$0xff]
    %v58 = vld [vmem:[%s2 + $0x10] sm:$0xff]
    %v59 = vld [vmem:[%s2 + $0x18] sm:$0xff]
    %v60 = vld [vmem:[%s2 + $0x20] sm:$0xff]
    %v61 = vld [vmem:[%s2 + $0x28] sm:$0xff]
    %v62 = vld [vmem:[%s2 + $0x30] sm:$0xff]
    %v63 = vld [vmem:[%s2 + $0x38] sm:$0xff]
    %vm64 = vcmask 523264
    %v66 = vsel %vm64, %v22, 0
    %v69 = vsel %vm64, %v23, 0
    %v72 = vsel %vm64, %v24, 0
    %v75 = vsel %vm64, %v25, 0
    %v78 = vsel %vm64, %v26, 0
    %v81 = vsel %vm64, %v27, 0
    %v84 = vsel %vm64, %v28, 0
    %v87 = vsel %vm64, %v29, 0
    %v90 = vsel %vm64, %v30, 0
    %v93 = vsel %vm64, %v31, 0
    %v96 = vsel %vm64, %v32, 0
    %v99 = vsel %vm64, %v33, 0
    %v102 = vsel %vm64, %v34, 0
    %v105 = vsel %vm64, %v35, 0
    %v108 = vsel %vm64, %v36, 0
    %v111 = vsel %vm64, %v37, 0
    %v114 = vsel %vm64, %v38, 0
    %v117 = vsel %vm64, %v39, 0
    %v120 = vsel %vm64, %v40, 0
    %v123 = vsel %vm64, %v41, 0
    %v126 = vsel %vm64, %v42, 0
    %v129 = vsel %vm64, %v43, 0
    %v132 = vsel %vm64, %v44, 0
    %v135 = vsel %vm64, %v45, 0
    %v138 = vsel %vm64, %v46, 0
    %v141 = vsel %vm64, %v47, 0
    %v144 = vsel %vm64, %v48, 0
    %v147 = vsel %vm64, %v49, 0
    %v150 = vsel %vm64, %v50, 0
    %v153 = vsel %vm64, %v51, 0
    %v156 = vsel %vm64, %v52, 0
    %v159 = vsel %vm64, %v53, 0
    %v162 = vsel %vm64, %v54, 0
    %v165 = vsel %vm64, %v55, 0
    %167 = vmatpush.xpose.msra.mxu0 %v117
    %168 = vmatpush.xpose.msra.mxu0 %v114
    %169 = vmatpush.xpose.msra.mxu0 %v111
    %170 = vmatpush.xpose.msra.mxu0 %v108
    %171 = vmatpush.xpose.msra.mxu0 %v105
    %172 = vmatpush.xpose.msra.mxu0 %v102
    %173 = vmatpush.xpose.msra.mxu0 %v99
    %174 = vmatpush.xpose.msra.mxu0 %v96
    %175 = vmatpush.xpose.msra.mxu0 %v93
    %176 = vmatpush.xpose.msra.mxu0 %v90
    %177 = vmatpush.xpose.msra.mxu0 %v87
    %178 = vmatpush.xpose.msra.mxu0 %v84
    %179 = vmatpush.xpose.msra.mxu0 %v81
    %180 = vmatpush.xpose.msra.mxu0 %v78
    %181 = vmatpush.xpose.msra.mxu0 %v75
    %182 = vmatpush.xpose.msra.mxu0 %v72
    %183 = vmatmul.f32.gmra.mxu0 %v66
    %v184 = vpop.f32.mrf.mxu0
    %v185 = vadd.f32 0.0, %v184
    %186 = vmatmul.f32.gmra.mxu0 %v69
    %v187 = vpop.f32.mrf.mxu0
    %v188 = vadd.f32 0.0, %v187
    %189 = vdwg.mxu0
    %190 = vmatpush.xpose.msra.mxu0 %v165
    %191 = vmatpush.xpose.msra.mxu0 %v162
    %192 = vmatpush.xpose.msra.mxu0 %v159
    %193 = vmatpush.xpose.msra.mxu0 %v156
    %194 = vmatpush.xpose.msra.mxu0 %v153
    %195 = vmatpush.xpose.msra.mxu0 %v150
    %196 = vmatpush.xpose.msra.mxu0 %v147
    %197 = vmatpush.xpose.msra.mxu0 %v144
    %198 = vmatpush.xpose.msra.mxu0 %v141
    %199 = vmatpush.xpose.msra.mxu0 %v138
    %200 = vmatpush.xpose.msra.mxu0 %v135
    %201 = vmatpush.xpose.msra.mxu0 %v132
    %202 = vmatpush.xpose.msra.mxu0 %v129
    %203 = vmatpush.xpose.msra.mxu0 %v126
    %204 = vmatpush.xpose.msra.mxu0 %v123
    %205 = vmatpush.xpose.msra.mxu0 %v120
    %206 = vmatmul.f32.gmra.mxu0 %v66
    %v207 = vpop.f32.mrf.mxu0
    %v208 = vadd.f32 0.0, %v207
    %209 = vmatmul.f32.gmra.mxu0 %v69
    %v210 = vpop.f32.mrf.mxu0
    %v211 = vadd.f32 0.0, %v210
    %212 = vdwg.mxu0
    %v213 = vxor.u32 %v185, 2147483648
    %v214 = vxor.u32 %v188, 2147483648
    %v215 = vmul.f32 %v213, 1.442695
    %v216 = vpow.pop %v215
    %v217 = vmul.f32 %v214, 1.442695
    %v218 = vpow.pop %v217
    %v219 = vadd.f32 %v216, 1.0
    %v220 = vadd.f32 %v218, 1.0
    %v221 = vrcp.pop %v219
    %v222 = vmul.f32 %v219, %v221
    %v223 = vsub.f32 1.0, %v222
    %v224 = vmul.f32 %v221, %v223
    %v225 = vadd.f32 %v221, %v224
    %vm226 = vweird.f32 %v219
    %vm227 = vweird.f32 %v221
    %vm228 = vmor %vm226, %vm227
    %v229 = vsel %vm228, %v221, %v225
    %v230 = vand.u32 2147483647, %v219
    %vm231 = vcmp.eq.f32.partialorder %v230, 8.507059e+37
    %v232 = vand.u32 %v219, 2147483648
    %v233 = vor.u32 1.1754944e-38, %v232
    %v234 = vsel %vm231, %v233, %v229
    %v235 = vmul.f32 1.0, %v234
    %v236 = vrcp.pop %v220
    %v237 = vmul.f32 %v220, %v236
    %v238 = vsub.f32 1.0, %v237
    %v239 = vmul.f32 %v236, %v238
    %v240 = vadd.f32 %v236, %v239
    %vm241 = vweird.f32 %v220
    %vm242 = vweird.f32 %v236
    %vm243 = vmor %vm241, %vm242
    %v244 = vsel %vm243, %v236, %v240
    %v245 = vand.u32 2147483647, %v220
    %vm246 = vcmp.eq.f32.partialorder %v245, 8.507059e+37
    %v247 = vand.u32 %v220, 2147483648
    %v248 = vor.u32 1.1754944e-38, %v247
    %v249 = vsel %vm246, %v248, %v244
    %v250 = vmul.f32 1.0, %v249
    %v251 = vmul.f32 %v185, %v235
    %v252 = vmul.f32 %v188, %v250
    %v253 = vmul.f32 %v251, %v208
    %v254 = vmul.f32 %v252, %v211
    %v255 = vld [vmem:[#allocation2] sm:$0xff]
    %v256 = vld [vmem:[#allocation2 + $0x8] sm:$0xff]
    %257 = vmatpush.xpose.msra.mxu0 0.0
    %258 = vmatpush.xpose.msra.mxu0 0.0
    %259 = vmatpush.xpose.msra.mxu0 0.0
    %260 = vmatpush.xpose.msra.mxu0 0.0
    %261 = vmatpush.xpose.msra.mxu0 0.0
    %262 = vmatpush.xpose.msra.mxu0 0.0
    %263 = vmatpush.xpose.msra.mxu0 0.0
    %264 = vmatpush.xpose.msra.mxu0 0.0
    %265 = vmatpush.xpose.msra.mxu0 %v63
    %266 = vmatpush.xpose.msra.mxu0 %v62
    %267 = vmatpush.xpose.msra.mxu0 %v61
    %268 = vmatpush.xpose.msra.mxu0 %v60
    %269 = vmatpush.xpose.msra.mxu0 %v59
    %270 = vmatpush.xpose.msra.mxu0 %v58
    %271 = vmatpush.xpose.msra.mxu0 %v57
    %272 = vmatpush.xpose.msra.mxu0 %v56
    %273 = vmatmul.f32.gmra.mxu0 %v253
    %v274 = vpop.f32.mrf.mxu0
    %v275 = vadd.f32 0.0, %v274
    %276 = vmatmul.f32.gmra.mxu0 %v254
    %v277 = vpop.f32.mrf.mxu0
    %v278 = vadd.f32 0.0, %v277
    %279 = vdwg.mxu0
    %v280 = vadd.f32 %v255, %v275
    %v281 = vadd.f32 %v256, %v278
    %282 = vst.msk [vmem:[#allocation2] sm:$0xff] %vm64, %v280
    %283 = vst.msk [vmem:[#allocation2 + $0x8] sm:$0xff] %vm64, %v281
    // Predicated region
    $region18: #{tpu_custom_call.1} parent=1 // pred_check
      _
    $region19: #{tpu_custom_call.1} parent=1 // pred_check_branch
      %285 = sbr.rel (0) target = $region21
    $region20: #{tpu_custom_call.1} parent=1 // pred_region
      %287 = vsyncadd [#allocation3], 0
      %s288 = sshll.u32 [#allocation2], 4
      %s289 = int_to_ptr.vmem [resolvable:$true] %s288
      %s290 = sshll.u32 %s3, 4
      %s291 = int_to_ptr.hbm [resolvable:$true] %s290
      %296 = dma.vmem_to_hbm [thread:$0]  %s289, 256, %s291, [#allocation3], 128, 128, 8
    $region21: #{tpu_custom_call.1} parent=1 // pred_fallthru
      _
    // Predicated region
    $region22: #{tpu_custom_call.1} parent=1 // pred_check
      _
    $region23: #{tpu_custom_call.1} parent=1 // pred_check_branch
      %298 = sbr.rel (0) target = $region25
    $region24: #{tpu_custom_call.1} parent=1 // pred_region
      %300 = dma.done [#allocation3], 256
    $region25: #{tpu_custom_call.1} parent=1 // pred_fallthru
      _
    %301 = vsyncpa [#allocation3], 1

</llo_original>
